<compile_context>
chip_gen: v7x
topology: tpu7x:2x2x1
jax: 0.10.0
libtpu: 0.0.40
codegen_flags: <defaults>
</compile_context>

<pallas_src>
import jax
import jax.numpy as jnp
from jax import lax
from jax.experimental import pallas as pl
from jax.experimental.pallas import tpu as pltpu


def _round_up(x, m):
    return ((x + m - 1) // m) * m


def _vmem_capacity_bytes():
    # Per-TensorCore VMEM for this generation (v7x: 64 MiB, v5e/v6e: 128 MiB).
    try:
        return int(pltpu.get_tpu_info().vmem_capacity_bytes)
    except Exception:
        return 64 * 1024 * 1024  # conservative fallback (v7x)


def _pick_batch_tile(B, batch_tile):
    # bf16 activations: tiles a multiple of 16 (native (16,128) packing).
    # Target ~4 grid steps so v7x's two TensorCores both get >=1 tile, with a
    # 64-row floor (MXU M-dim) once the batch is large enough.
    B16 = _round_up(B, 16)
    if B16 <= 32:
        return B16
    tb = _round_up(-(-B16 // 4), 16)
    if B16 >= 128:
        tb = max(tb, 64)
    return max(16, min(tb, batch_tile, B16))


def smith_pooler_kernel(x_ref, wt_ref, b_ref, out_ref, acc_ref):
    # x_ref  : (TB, tk)      bf16 — first-token activations, K-slab
    # wt_ref : (tk, H_pad)   bf16 — pre-transposed weight (in, out), K-slab
    # b_ref  : (1, H_pad)    f32  — bias, resident
    # out_ref: (TB, H_pad)         — block constant across K (written at last k)
    # acc_ref: (TB, H_pad)   f32  — VMEM accumulator scratch
    k = pl.program_id(1)

    @pl.when(k == 0)
    def _():
        acc_ref[...] = jnp.zeros_like(acc_ref)

    # Canonical MXU feed: bf16 x bf16 -> f32 accumulation.
    acc_ref[...] += jnp.dot(x_ref[...], wt_ref[...],
                            preferred_element_type=jnp.float32)

    @pl.when(k == pl.num_programs(1) - 1)
    def _():
        y = jnp.tanh(acc_ref[...] + b_ref[...])
        # L2 normalize over hidden: y * rsqrt(max(sum(y^2), eps^2)), eps=1e-12
        # (== y / max(||y||, 1e-12)).  Padded hidden columns are exactly zero
        # (zero-padded W.T columns and bias), so the norm is unaffected.
        ss = jnp.sum(y * y, axis=-1, keepdims=True)
        inv = lax.rsqrt(jnp.maximum(ss, 1e-24))
        out_ref[...] = (y * inv).astype(out_ref.dtype)


def smith_pooler(hidden_states, weight, bias, *, batch_tile=256, k_tile=None):
    """hidden_states: [B, S, H]; weight: [H, H] (out, in); bias: [H]."""
    B, S, H = hidden_states.shape
    out_dtype = hidden_states.dtype
    out_bytes = jnp.dtype(out_dtype).itemsize

    H_pad = _round_up(H, 128)
    TB = _pick_batch_tile(B, batch_tile)
    B_pad = _round_up(B, TB)

    # First-token selection + lane/sublane padding + bf16 cast in one small
    # fused XLA pass over B*H elements (weight traffic dominates this).
    x = hidden_states[:, 0, :]
    x = jnp.pad(x, ((0, B_pad - B), (0, H_pad - H))).astype(jnp.bfloat16)
    # Pre-transpose to [in, out] so the kernel contraction is lhs-last /
    # rhs-first (no in-kernel transpose, contiguous (tk, H_pad) K-slabs).
    wT = jnp.pad(weight.T, ((0, H_pad - H), (0, H_pad - H))).astype(jnp.bfloat16)
    b = jnp.pad(bias, (0, H_pad - H)).astype(jnp.float32).reshape(1, H_pad)

    # ---- pick the contraction tile tk so everything fits this generation's
    # VMEM (single-buffer the weight when it is fully resident) ----
    budget = int(_vmem_capacity_bytes() * 0.85)

    def vmem_needed(tk):
        nk_ = H_pad // tk
        w_bufs = 1 if nk_ == 1 else 2
        return (w_bufs * tk * H_pad * 2          # bf16 weight slab(s)
                + 2 * TB * tk * 2                # double-buffered bf16 x tiles
                + 2 * TB * H_pad * out_bytes     # double-buffered out tiles
                + TB * H_pad * 4                 # f32 accumulator scratch
                + 2 * TB * H_pad * 4             # tanh / normalize f32 temps
                + H_pad * 4)                     # bias

    if k_tile is not None:
        tk = k_tile
        assert tk % 128 == 0 and H_pad % tk == 0
    else:
        tk = H_pad
        while tk > 128 and vmem_needed(tk) + (2 << 20) > budget:
            nxt = tk - 128
            while H_pad % nxt:
                nxt -= 128
            tk = nxt
    nk = H_pad // tk

    vmem_limit = int(max(32 * 1024 * 1024,
                         min(vmem_needed(tk) + (2 << 20), budget)))

    # Weight: single-buffered when resident (constant block), default
    # double-buffered when streamed across K so DMA pipelines under the MXU.
    if nk == 1:
        w_spec = pl.BlockSpec((tk, H_pad), lambda i, k: (k, 0),
                              pipeline_mode=pl.Buffered(1))
    else:
        w_spec = pl.BlockSpec((tk, H_pad), lambda i, k: (k, 0))
    b_spec = pl.BlockSpec((1, H_pad), lambda i, k: (0, 0),
                          pipeline_mode=pl.Buffered(1))

    out = pl.pallas_call(
        smith_pooler_kernel,
        out_shape=jax.ShapeDtypeStruct((B_pad, H_pad), out_dtype),
        grid_spec=pltpu.PrefetchScalarGridSpec(
            num_scalar_prefetch=0,
            grid=(B_pad // TB, nk),
            in_specs=[
                pl.BlockSpec((TB, tk), lambda i, k: (i, k)),   # x K-slabs
                w_spec,                                        # W.T K-slabs
                b_spec,                                        # bias resident
            ],
            out_specs=pl.BlockSpec((TB, H_pad), lambda i, k: (i, 0)),
            scratch_shapes=[pltpu.VMEM((TB, H_pad), jnp.float32)],
        ),
        compiler_params=pltpu.CompilerParams(
            dimension_semantics=("parallel", "arbitrary"),
            vmem_limit_bytes=vmem_limit,
        ),
    )(x, wT, b)

    return out[:B, :H]


def smith_pooler_ref(hidden_states, weight, bias):
    # Reference with the same bf16 quantization of x / W (f32 accumulation).
    x = hidden_states[:, 0].astype(jnp.bfloat16).astype(jnp.float32)
    w = weight.astype(jnp.bfloat16).astype(jnp.float32)
    y = jnp.tanh(x @ w.T + bias)
    n = jnp.maximum(jnp.linalg.norm(y, axis=1, keepdims=True), 1e-12)
    return y / n


if __name__ == "__main__":
    key = jax.random.PRNGKey(0)

    # Case 1: tiny pooler shape (resident weight, single K step).
    B, S, H = 2, 8, 32
    k_hs, k_w, k_b, key = jax.random.split(key, 4)
    hidden_states = jax.random.normal(k_hs, (B, S, H), dtype=jnp.float32)
    weight = jax.random.normal(k_w, (H, H), dtype=jnp.float32) * (1.0 / jnp.sqrt(H))
    bias = jax.random.normal(k_b, (H,), dtype=jnp.float32) * 0.01

    out = smith_pooler(hidden_states, weight, bias)
    jax.block_until_ready(out)
    ref = smith_pooler_ref(hidden_states, weight, bias)
    assert out.shape == (B, H)
    assert jnp.allclose(out, ref, atol=1e-4, rtol=1e-4)

    # Case 2: exercise the K-tiled accumulation path (H_pad=256, tk=128 -> 2 steps).
    B2, S2, H2 = 4, 3, 256
    k_hs, k_w, k_b, key = jax.random.split(key, 4)
    hs2 = jax.random.normal(k_hs, (B2, S2, H2), dtype=jnp.float32)
    w2 = jax.random.normal(k_w, (H2, H2), dtype=jnp.float32) * (1.0 / jnp.sqrt(H2))
    b2 = jax.random.normal(k_b, (H2,), dtype=jnp.float32) * 0.01

    out2 = smith_pooler(hs2, w2, b2, k_tile=128)
    jax.block_until_ready(out2)
    ref2 = smith_pooler_ref(hs2, w2, b2)
    assert out2.shape == (B2, H2)
    assert jnp.allclose(out2, ref2, atol=1e-4, rtol=1e-4)

    print("KERNEL_OK")
</pallas_src>

<mosaic_0001>
module attributes {stable_mosaic.version = 11 : i64} {
  func.func @smith_pooler_kernel(%arg0: i32, %arg1: i32, %arg2: memref<16x128xbf16, #tpu.memory_space<vmem>>, %arg3: memref<128x128xbf16, #tpu.memory_space<vmem>>, %arg4: memref<1x128xf32, #tpu.memory_space<vmem>>, %arg5: memref<16x128xf32, #tpu.memory_space<vmem>>, %arg6: memref<16x128xf32, #tpu.memory_space<vmem>>) attributes {dimension_semantics = [#tpu.dimension_semantics<parallel>, #tpu.dimension_semantics<arbitrary>], iteration_bounds = array<i64: 1, 1>, scalar_prefetch = 0 : i64, scratch_operands = 1 : i64, tpu.core_type = #tpu.core_type<tc>, window_params = [{transform_indices = @transform_0, window_bounds = array<i64: 16, 128>}, {pipeline_mode = #tpu.pipeline_mode<synchronous>, transform_indices = @transform_1, window_bounds = array<i64: 128, 128>}, {pipeline_mode = #tpu.pipeline_mode<synchronous>, transform_indices = @transform_2, window_bounds = array<i64: 1, 128>}, {transform_indices = @transform_3, window_bounds = array<i64: 16, 128>}]} {
    %c0_i32 = arith.constant 0 : i32
    %0 = arith.cmpi eq, %arg1, %c0_i32 : i32
    %1 = arith.extui %0 : i1 to i32
    %c0_i32_0 = arith.constant 0 : i32
    %2 = arith.cmpi ne, %1, %c0_i32_0 : i32
    scf.if %2 {
      %cst_10 = arith.constant 0.000000e+00 : f32
      %12 = vector.broadcast %cst_10 : f32 to vector<16x128xf32>
      %c0_11 = arith.constant 0 : index
      %c0_12 = arith.constant 0 : index
      %13 = vector.load %arg6[%c0_11, %c0_12] : memref<16x128xf32, #tpu.memory_space<vmem>>, vector<16x128xf32>
      tpu.vector_store %arg6[%c0_11, %c0_12], %12 {strides = array<i32>} : memref<16x128xf32, #tpu.memory_space<vmem>>, vector<16x128xf32>,
    } else {
    }
    %c0 = arith.constant 0 : index
    %c0_1 = arith.constant 0 : index
    %3 = vector.load %arg6[%c0, %c0_1] : memref<16x128xf32, #tpu.memory_space<vmem>>, vector<16x128xf32>
    %c0_2 = arith.constant 0 : index
    %c0_3 = arith.constant 0 : index
    %4 = vector.load %arg2[%c0_2, %c0_3] : memref<16x128xbf16, #tpu.memory_space<vmem>>, vector<16x128xbf16>
    %c0_4 = arith.constant 0 : index
    %c0_5 = arith.constant 0 : index
    %5 = vector.load %arg3[%c0_4, %c0_5] : memref<128x128xbf16, #tpu.memory_space<vmem>>, vector<128x128xbf16>
    %cst = arith.constant dense<0.000000e+00> : vector<16x128xf32>
    %6 = tpu.matmul %4, %5, %cst {dimension_numbers = #tpu.dot_dimension_numbers<[1], [0], [0], [1], [0, 0, 1, 1], [], []>} : vector<16x128xbf16>, vector<128x128xbf16>, vector<16x128xf32> -> vector<16x128xf32>
    %7 = arith.addf %3, %6 : vector<16x128xf32>
    %c0_6 = arith.constant 0 : index
    %c0_7 = arith.constant 0 : index
    %8 = vector.load %arg6[%c0_6, %c0_7] : memref<16x128xf32, #tpu.memory_space<vmem>>, vector<16x128xf32>
    tpu.vector_store %arg6[%c0_6, %c0_7], %7 {strides = array<i32>} : memref<16x128xf32, #tpu.memory_space<vmem>>, vector<16x128xf32>,
    %c0_i32_8 = arith.constant 0 : i32
    %9 = arith.cmpi eq, %arg1, %c0_i32_8 : i32
    %10 = arith.extui %9 : i1 to i32
    %c0_i32_9 = arith.constant 0 : i32
    %11 = arith.cmpi ne, %10, %c0_i32_9 : i32
    scf.if %11 {
      %c0_10 = arith.constant 0 : index
      %c0_11 = arith.constant 0 : index
      %12 = vector.load %arg6[%c0_10, %c0_11] : memref<16x128xf32, #tpu.memory_space<vmem>>, vector<16x128xf32>
      %c0_12 = arith.constant 0 : index
      %c0_13 = arith.constant 0 : index
      %13 = vector.load %arg4[%c0_12, %c0_13] : memref<1x128xf32, #tpu.memory_space<vmem>>, vector<1x128xf32>
      %14 = vector.broadcast %13 : vector<1x128xf32> to vector<16x128xf32>
      %15 = arith.addf %12, %14 : vector<16x128xf32>
      %16 = math.tanh %15 : vector<16x128xf32>
      %17 = arith.mulf %16, %16 : vector<16x128xf32>
      %cst_14 = arith.constant dense<0.000000e+00> : vector<16xf32>
      %18 = vector.multi_reduction <add>, %17, %cst_14 [1] : vector<16x128xf32> to vector<16xf32>
      %19 = vector.shape_cast %18 : vector<16xf32> to vector<16x1xf32>
      %cst_15 = arith.constant 1.000000e-24 : f32
      %20 = vector.broadcast %cst_15 : f32 to vector<16x1xf32>
      %21 = arith.maximumf %19, %20 : vector<16x1xf32>
      %22 = math.rsqrt %21 : vector<16x1xf32>
      %23 = vector.broadcast %22 : vector<16x1xf32> to vector<16x128xf32>
      %24 = arith.mulf %16, %23 : vector<16x128xf32>
      %c0_16 = arith.constant 0 : index
      %c0_17 = arith.constant 0 : index
      %25 = vector.load %arg5[%c0_16, %c0_17] : memref<16x128xf32, #tpu.memory_space<vmem>>, vector<16x128xf32>
      tpu.vector_store %arg5[%c0_16, %c0_17], %24 {strides = array<i32>} : memref<16x128xf32, #tpu.memory_space<vmem>>, vector<16x128xf32>,
    } else {
    }
    return
  }
  func.func @transform_0(%arg0: i32, %arg1: i32) -> (i32, i32) {
    %c0_i32 = arith.constant 0 : i32
    return %arg0, %arg1 : i32, i32
  }
  func.func @transform_1(%arg0: i32, %arg1: i32) -> (i32, i32) {
    %c0_i32 = arith.constant 0 : i32
    %c0_i32_0 = arith.constant 0 : i32
    return %arg1, %c0_i32 : i32, i32
  }
  func.func @transform_2(%arg0: i32, %arg1: i32) -> (i32, i32) {
    %c0_i32 = arith.constant 0 : i32
    %c0_i32_0 = arith.constant 0 : i32
    %c0_i32_1 = arith.constant 0 : i32
    return %c0_i32, %c0_i32_0 : i32, i32
  }
  func.func @transform_3(%arg0: i32, %arg1: i32) -> (i32, i32) {
    %c0_i32 = arith.constant 0 : i32
    %c0_i32_0 = arith.constant 0 : i32
    return %arg0, %c0_i32 : i32, i32
  }
}

</mosaic_0001>

<llo_original>
// kernel: tpu_custom_call.1
$region0: #{tpu_custom_call.1}
  #allocation0 [shape = 'u32[]', space=smem, size = 0x4, offset = 0x4, fixed_abs, tag = 'smem constant byte address 0x4 - core index']
  #allocation1 [shape = 'u32[144,128]{1,0:T(1,128)}', space=vmem, size = 0x12000, scoped, tag = 'internal scratch']
  #allocation2 [shape = 'f32[16,128]{1,0:T(8,128)}', space=vmem, size = 0x2000, scoped, tag = 'scratch operand']
  %s0 = inlined_call_operand.hbm [shape: bf16[16,128], index: 0, kind: input, shape index: {}]
  %s1 = inlined_call_operand.hbm [shape: bf16[128,128], index: 1, kind: input, shape index: {}]
  %s2 = inlined_call_operand.vmem [shape: f32[1,128], index: 2, kind: input, shape index: {}]
  %s3 = inlined_call_operand.hbm [shape: f32[16,128], index: 3, kind: output, shape index: {}]
  %s4 = sld [smem:[#allocation0]]
  $region38: #{tpu_custom_call.1} parent=0
    _
  %s6 = ssub.s32 1, %s4
  %s7 = scalar_select 0, %s6, %s4
  $region1: #{tpu_custom_call.1} parent=0
    #allocation3 [shape = 'u8[4096]{0}', space=vmem, size = 0x1000, scoped, tag = 'input window, operand 0, single buffered']
    #allocation4 [shape = 's32[1]{0}', space=sflag, size = 0x4, scoped, tag = 'scoped memory for tpu_custom_call.1']
    #allocation5 [shape = 's32[1]{0}', space=sflag, size = 0x4, scoped, tag = 'scoped memory for tpu_custom_call.1']
    #allocation6 [shape = 'u8[32768]{0}', space=vmem, size = 0x8000, scoped, tag = 'input window, operand 1, single buffered']
    #allocation7 [shape = 's32[1]{0}', space=sflag, size = 0x4, scoped, tag = 'scoped memory for tpu_custom_call.1']
    #allocation8 [shape = 'u8[8192]{0}', space=vmem, size = 0x2000, scoped, tag = 'output window, operand 0, single buffered']
    %8 = vsyncpa [#allocation4], 0
    %9 = vsyncpa [#allocation7], 0
    %10 = vsyncpa [#allocation5], 0
    // Predicated region
    $region2: #{tpu_custom_call.1} parent=1 // pred_check
      _
    $region3: #{tpu_custom_call.1} parent=1 // pred_check_branch
      %12 = sbr.rel (0) target = $region5
    $region4: #{tpu_custom_call.1} parent=1 // pred_region
      %s14 = ssub.s32 128, 128
      %15 = vsyncadd [#allocation4], %s14
      %s16 = sshll.u32 [#allocation3], 4
      %s17 = int_to_ptr.vmem [resolvable:$true] %s16
      %22 = dma.hbm_to_vmem [thread:$0]  %s0, 128, %s17, [#allocation4], 64, 64, 4
    $region5: #{tpu_custom_call.1} parent=1 // pred_fallthru
      _
    // Predicated region
    $region6: #{tpu_custom_call.1} parent=1 // pred_check
      _
    $region7: #{tpu_custom_call.1} parent=1 // pred_check_branch
      %24 = sbr.rel (0) target = $region9
    $region8: #{tpu_custom_call.1} parent=1 // pred_region
      %s26 = ssub.s32 1024, 1024
      %27 = vsyncadd [#allocation7], %s26
      %s28 = sshll.u32 [#allocation6], 4
      %s29 = int_to_ptr.vmem [resolvable:$true] %s28
      %34 = dma.hbm_to_vmem [thread:$0]  %s1, 1024, %s29, [#allocation7], 64, 64, 4
    $region9: #{tpu_custom_call.1} parent=1 // pred_fallthru
      _
    // Predicated region
    $region10: #{tpu_custom_call.1} parent=1 // pred_check
      _
    $region11: #{tpu_custom_call.1} parent=1 // pred_check_branch
      %36 = sbr.rel (0) target = $region13
    $region12: #{tpu_custom_call.1} parent=1 // pred_region
      _
    $region13: #{tpu_custom_call.1} parent=1 // pred_fallthru
      _
    // Predicated region
    $region14: #{tpu_custom_call.1} parent=1 // pred_check
      _
    $region15: #{tpu_custom_call.1} parent=1 // pred_check_branch
      %38 = sbr.rel (0) target = $region17
    $region16: #{tpu_custom_call.1} parent=1 // pred_region
      %39 = dma.done [#allocation4], 128
    $region17: #{tpu_custom_call.1} parent=1 // pred_fallthru
      _
    // Predicated region
    $region18: #{tpu_custom_call.1} parent=1 // pred_check
      _
    $region19: #{tpu_custom_call.1} parent=1 // pred_check_branch
      %41 = sbr.rel (0) target = $region21
    $region20: #{tpu_custom_call.1} parent=1 // pred_region
      %42 = dma.done [#allocation7], 1024
    $region21: #{tpu_custom_call.1} parent=1 // pred_fallthru
      _
    %p44 = scmp.eq.s32.totalorder 0, 0
    // Predicated region
    $region22: #{tpu_custom_call.1} parent=1 // pred_check
      %p45 = pneg %p44
    $region23: #{tpu_custom_call.1} parent=1 // pred_check_branch
      %47 = sbr.rel (%p45) target = $region25
    $region24: #{tpu_custom_call.1} parent=1 // pred_region
      %48 = vst [vmem:[#allocation2] sm:$0xff] 0.0
      %49 = vst [vmem:[#allocation2 + $0x8] sm:$0xff] 0.0
    $region25: #{tpu_custom_call.1} parent=1 // pred_fallthru
      _
    %v50 = vld [vmem:[#allocation2] sm:$0xff]
    %v51 = vld [vmem:[#allocation2 + $0x8] sm:$0xff]
    %v52 = vld [vmem:[#allocation3] sm:$0xf]
    %v53 = vld [vmem:[#allocation3 + $0x4] sm:$0xf]
    %v54 = vld [vmem:[#allocation6] sm:$0xf]
    %v55 = vld [vmem:[#allocation6 + $0x4] sm:$0xf]
    %v56 = vld [vmem:[#allocation6 + $0x8] sm:$0xf]
    %v57 = vld [vmem:[#allocation6 + $0xc] sm:$0xf]
    %v58 = vld [vmem:[#allocation6 + $0x10] sm:$0xf]
    %v59 = vld [vmem:[#allocation6 + $0x14] sm:$0xf]
    %v60 = vld [vmem:[#allocation6 + $0x18] sm:$0xf]
    %v61 = vld [vmem:[#allocation6 + $0x1c] sm:$0xf]
    %v62 = vld [vmem:[#allocation6 + $0x20] sm:$0xf]
    %v63 = vld [vmem:[#allocation6 + $0x24] sm:$0xf]
    %v64 = vld [vmem:[#allocation6 + $0x28] sm:$0xf]
    %v65 = vld [vmem:[#allocation6 + $0x2c] sm:$0xf]
    %v66 = vld [vmem:[#allocation6 + $0x30] sm:$0xf]
    %v67 = vld [vmem:[#allocation6 + $0x34] sm:$0xf]
    %v68 = vld [vmem:[#allocation6 + $0x38] sm:$0xf]
    %v69 = vld [vmem:[#allocation6 + $0x3c] sm:$0xf]
    %v72 = vunpack.c.l.b16 %v52
    %v73 = vunpack.c.l.b16 %v53
    %v74 = vpack.c.b16 %v73, %v72
    %v92 = vunpack.c.l.b16 %v54
    %v93 = vunpack.c.l.b16 %v55
    %v94 = vunpack.c.l.b16 %v56
    %v95 = vunpack.c.l.b16 %v57
    %v96 = vunpack.c.l.b16 %v58
    %v97 = vunpack.c.l.b16 %v59
    %v98 = vunpack.c.l.b16 %v60
    %v99 = vunpack.c.l.b16 %v61
    %v100 = vunpack.c.l.b16 %v62
    %v101 = vunpack.c.l.b16 %v63
    %v102 = vunpack.c.l.b16 %v64
    %v103 = vunpack.c.l.b16 %v65
    %v104 = vunpack.c.l.b16 %v66
    %v105 = vunpack.c.l.b16 %v67
    %v106 = vunpack.c.l.b16 %v68
    %v107 = vunpack.c.l.b16 %v69
    %v108 = vpack.c.b16 %v93, %v92
    %v109 = vpack.c.b16 %v95, %v94
    %v110 = vpack.c.b16 %v97, %v96
    %v111 = vpack.c.b16 %v99, %v98
    %v112 = vpack.c.b16 %v101, %v100
    %v113 = vpack.c.b16 %v103, %v102
    %v114 = vpack.c.b16 %v105, %v104
    %v115 = vpack.c.b16 %v107, %v106
    %124 = vmatprep.subr.bf16.mxu0 0
    %125 = vmatpush1.bf16.msra.mxu0 %v108
    %126 = vmatprep.subr.bf16.mxu0 0
    %127 = vmatpush1.bf16.msra.mxu0 %v109
    %128 = vmatprep.subr.bf16.mxu0 0
    %129 = vmatpush1.bf16.msra.mxu0 %v110
    %130 = vmatprep.subr.bf16.mxu0 0
    %131 = vmatpush1.bf16.msra.mxu0 %v111
    %132 = vmatprep.subr.bf16.mxu0 0
    %133 = vmatpush1.bf16.msra.mxu0 %v112
    %134 = vmatprep.subr.bf16.mxu0 0
    %135 = vmatpush1.bf16.msra.mxu0 %v113
    %136 = vmatprep.subr.bf16.mxu0 0
    %137 = vmatpush1.bf16.msra.mxu0 %v114
    %138 = vmatprep.subr.bf16.mxu0 0
    %139 = vmatpush1.bf16.msra.mxu0 %v115
    %140 = vmatprep.subr.bf16.mxu0 0
    %141 = vmatpush1.bf16.msra.mxu0 0
    %142 = vmatprep.subr.bf16.mxu0 0
    %143 = vmatpush1.bf16.msra.mxu0 0
    %144 = vmatprep.subr.bf16.mxu0 0
    %145 = vmatpush1.bf16.msra.mxu0 0
    %146 = vmatprep.subr.bf16.mxu0 0
    %147 = vmatpush1.bf16.msra.mxu0 0
    %148 = vmatprep.subr.bf16.mxu0 0
    %149 = vmatpush1.bf16.msra.mxu0 0
    %150 = vmatprep.subr.bf16.mxu0 0
    %151 = vmatpush1.bf16.msra.mxu0 0
    %152 = vmatprep.subr.bf16.mxu0 0
    %153 = vmatpush1.bf16.msra.mxu0 0
    %154 = vmatprep.subr.bf16.mxu0 0
    %155 = vmatpush1.bf16.msra.mxu0 0
    %156 = vmatprep.mubr.bf16.mxu0 0
    %157 = vmatmul.mubr.bf16.gmra.mrb[0].mxu0 %v74
    %v158 = vpop.f32.mrb[0].mxu0
    %v159 = vadd.f32 0.0, %v158
    %v160 = vpop.f32.mrb[0].mxu0
    %v161 = vpop.f32.mrb[0].mxu0
    %v162 = vadd.f32 0.0, %v161
    %v163 = vpop.f32.mrb[0].mxu0
    %164 = vdwg.mxu0
    %v165 = vadd.f32 %v50, %v159
    %v166 = vadd.f32 %v51, %v162
    %167 = vst [vmem:[#allocation2] sm:$0xff] %v165
    %168 = vst [vmem:[#allocation2 + $0x8] sm:$0xff] %v166
    // Predicated region
    $region26: #{tpu_custom_call.1} parent=1 // pred_check
      %p169 = pneg %p44
    $region27: #{tpu_custom_call.1} parent=1 // pred_check_branch
      %171 = sbr.rel (%p169) target = $region29
    $region28: #{tpu_custom_call.1} parent=1 // pred_region
      %v172 = vld [vmem:[#allocation2] sm:$0xff]
      %v173 = vld [vmem:[#allocation2 + $0x8] sm:$0xff]
      %v174 = vld [vmem:[%s2] sm:$0x1]
      %v176 = vlaneseq
      %v177 = vshrl.u32 %v176, 7
      %v178 = vsub.s32 0, %v177
      %v179 = vrot.slane %v174, %v178
      %v181 = vadd.f32 %v172, %v179
      %v182 = vadd.f32 %v173, %v179
      %v183 = vtanh.pop %v181
      %v184 = vtanh.pop %v182
      %v185 = vmul.f32 %v183, %v183
      %v186 = vmul.f32 %v184, %v184
      %187 = vadd.xlane.f32.xlu0 %v185
      %v188 = vpop.xlane.xlu0 %187
      %189 = vadd.xlane.f32.xlu0 %v186
      %v190 = vpop.xlane.xlu0 %189
      %v191 = vmax.f32 %v188, 1e-24
      %v192 = vmax.f32 %v190, 1e-24
      %v193 = vrsqrt.pop %v191
      %v194 = vrsqrt.pop %v192
      %v195 = vmul.f32 %v183, %v193
      %v196 = vmul.f32 %v184, %v194
      %197 = vst [vmem:[#allocation8] sm:$0xff] %v195
      %198 = vst [vmem:[#allocation8 + $0x8] sm:$0xff] %v196
    $region29: #{tpu_custom_call.1} parent=1 // pred_fallthru
      _
    // Predicated region
    $region30: #{tpu_custom_call.1} parent=1 // pred_check
      _
    $region31: #{tpu_custom_call.1} parent=1 // pred_check_branch
      %200 = sbr.rel (0) target = $region33
    $region32: #{tpu_custom_call.1} parent=1 // pred_region
      %s202 = ssub.s32 256, 256
      %203 = vsyncadd [#allocation5], %s202
      %s204 = sshll.u32 [#allocation8], 4
      %s205 = int_to_ptr.vmem [resolvable:$true] %s204
      %210 = dma.vmem_to_hbm [thread:$0]  %s205, 256, %s3, [#allocation5], 128, 128, 8
    $region33: #{tpu_custom_call.1} parent=1 // pred_fallthru
      _
    // Predicated region
    $region34: #{tpu_custom_call.1} parent=1 // pred_check
      _
    $region35: #{tpu_custom_call.1} parent=1 // pred_check_branch
      %212 = sbr.rel (0) target = $region37
    $region36: #{tpu_custom_call.1} parent=1 // pred_region
      %213 = dma.done [#allocation5], 256
    $region37: #{tpu_custom_call.1} parent=1 // pred_fallthru
      _
    %214 = vsyncpa [#allocation4], 1
    %215 = vsyncpa [#allocation7], 1
    %216 = vsyncpa [#allocation5], 1

</llo_original>
